<compile_context>
chip_gen: v7x
topology: tpu7x:2x2x1
jax: 0.10.0
libtpu: 0.0.40
codegen_flags: <defaults>
</compile_context>

<pallas_src>
import functools
import math

import jax
import jax.numpy as jnp
from jax.experimental import pallas as pl
from jax.experimental.pallas import tpu as pltpu


_VMEM_LIMIT_BYTES = 32 * 1024 * 1024   # safe scoped-VMEM limit on v5e/v6e/v7x
_TILE_BUDGET_BYTES = 24 * 1024 * 1024  # 2 bufs x (input block + output block)


def _choose_spatial_tile(S, C, itemsize):
    """Largest lane tile (multiple of 128 dividing S, or full S) in VMEM budget."""
    if S % 128 != 0:
        # A block equal to the full array dim is always legal (tiny / odd S).
        return S
    # Sub-32-bit dtypes pack along sublanes; C pads up to the sublane pack.
    pack = {4: 8, 2: 16, 1: 32}.get(itemsize, 8)
    c_pad = max(pack, pl.cdiv(C, pack) * pack)
    bytes_per_lane = 4 * c_pad * itemsize            # double-buffered in + out
    max_lanes = max(128, (_TILE_BUDGET_BYTES // bytes_per_lane) // 128 * 128)
    tile = min(S, max_lanes)
    while S % tile != 0:                             # keep tile a divisor of S
        tile -= 128
    return tile


def _prenorm_kernel(x_ref, gamma_ref, o_ref, *, eps, fn):
    # x_ref block: (1, C, T)   gamma_ref: (1, C, 1)
    x = x_ref[...].astype(jnp.float32)
    mean = jnp.mean(x, axis=1, keepdims=True)                        # (1, 1, T)
    var = jnp.mean((x - mean) * (x - mean), axis=1, keepdims=True)   # biased var
    inv_std = jax.lax.rsqrt(var + eps)                               # EUP rsqrt
    y = (x - mean) * inv_std * gamma_ref[...].astype(jnp.float32)
    if fn is not None:
        y = fn(y)                                   # fused elementwise epilogue
    o_ref[...] = y.astype(o_ref.dtype)


def layer_norm_channel(x, gamma, *, eps=1e-5, fused_fn=None, spatial_tile=None):
    """x: (B, C, D, H, W) NCDHW, gamma: (C,).  Returns same shape/dtype as x.

    If `fused_fn` is given it must be an elementwise (shape-preserving) JAX
    function; it is applied inside the kernel before the store.
    """
    B, C = x.shape[0], x.shape[1]
    S = math.prod(x.shape[2:])

    x3 = x.reshape(B, C, S)
    g3 = jnp.asarray(gamma).reshape(1, C, 1)

    if spatial_tile is None:
        spatial_tile = _choose_spatial_tile(S, C, x.dtype.itemsize)
    num_tiles = S // spatial_tile

    kernel = functools.partial(_prenorm_kernel, eps=eps, fn=fused_fn)

    out3 = pl.pallas_call(
        kernel,
        out_shape=jax.ShapeDtypeStruct((B, C, S), x.dtype),
        grid_spec=pltpu.PrefetchScalarGridSpec(
            num_scalar_prefetch=0,
            grid=(B, num_tiles),
            in_specs=[
                pl.BlockSpec((1, C, spatial_tile), lambda b, s: (b, 0, s)),
                pl.BlockSpec((1, C, 1), lambda b, s: (0, 0, 0)),
            ],
            out_specs=pl.BlockSpec((1, C, spatial_tile), lambda b, s: (b, 0, s)),
        ),
        compiler_params=pltpu.CompilerParams(
            dimension_semantics=("parallel", "parallel"),
            vmem_limit_bytes=_VMEM_LIMIT_BYTES,
        ),
    )(x3, g3)

    return out3.reshape(x.shape)


def prenorm(x, gamma, fn=None, *, eps=1e-5, fuse_fn=True):
    """PreNorm.forward: fn(LayerNorm(x)).

    Elementwise `fn` is fused into the kernel epilogue (one HBM pass).
    Non-elementwise `fn` (e.g. attention / conv) is applied outside the kernel.
    """
    if fn is None:
        return layer_norm_channel(x, gamma, eps=eps)
    if fuse_fn:
        # TODO(synk): only valid for elementwise fn; non-elementwise wrapped
        # modules must set fuse_fn=False and run as separate JAX/Pallas ops.
        return layer_norm_channel(x, gamma, eps=eps, fused_fn=fn)
    return fn(layer_norm_channel(x, gamma, eps=eps))


def _reference(x, gamma, eps=1e-5):
    xf = x.astype(jnp.float32)
    mean = jnp.mean(xf, axis=1, keepdims=True)
    var = jnp.mean((xf - mean) ** 2, axis=1, keepdims=True)
    g = jnp.asarray(gamma).reshape(1, -1, 1, 1, 1).astype(jnp.float32)
    return ((xf - mean) / jnp.sqrt(var + eps) * g).astype(x.dtype)


if __name__ == "__main__":
    key = jax.random.PRNGKey(0)
    B, C, D, H, W = 2, 4, 8, 8, 8  # S = 512

    k1, _ = jax.random.split(key)
    x = jax.random.normal(k1, (B, C, D, H, W), dtype=jnp.float32)
    # PyTorch init: LayerNorm.gamma = ones(1, dim, 1, 1, 1)
    gamma = jnp.ones((C,), dtype=jnp.float32)

    # PreNorm with identity fn (pure LayerNorm path).
    out = prenorm(x, gamma)
    out = jax.block_until_ready(out)
    ref = _reference(x, gamma)
    assert out.shape == x.shape and out.dtype == x.dtype
    assert jnp.max(jnp.abs(out - ref)) < 1e-5

    # PreNorm with a fused elementwise fn (activation) — single HBM pass.
    out_fn = prenorm(x, gamma, fn=jnp.tanh)
    out_fn = jax.block_until_ready(out_fn)
    ref_fn = jnp.tanh(ref.astype(jnp.float32)).astype(x.dtype)
    assert jnp.max(jnp.abs(out_fn - ref_fn)) < 1e-5

    print("KERNEL_OK")
</pallas_src>

<mosaic_0001>
module attributes {stable_mosaic.version = 11 : i64} {
  func.func @_prenorm_kernel(%arg0: i32, %arg1: i32, %arg2: memref<1x4x512xf32, #tpu.memory_space<vmem>>, %arg3: memref<1x4x1xf32, #tpu.memory_space<vmem>>, %arg4: memref<1x4x512xf32, #tpu.memory_space<vmem>>) attributes {dimension_semantics = [#tpu.dimension_semantics<parallel>, #tpu.dimension_semantics<parallel>], iteration_bounds = array<i64: 2, 1>, scalar_prefetch = 0 : i64, scratch_operands = 0 : i64, tpu.core_type = #tpu.core_type<tc>, window_params = [{transform_indices = @transform_0, window_bounds = array<i64: 1, 4, 512>}, {pipeline_mode = #tpu.pipeline_mode<synchronous>, transform_indices = @transform_1, window_bounds = array<i64: 1, 4, 1>}, {transform_indices = @transform_2, window_bounds = array<i64: 1, 4, 512>}]} {
    %c0 = arith.constant 0 : index
    %c0_0 = arith.constant 0 : index
    %c0_1 = arith.constant 0 : index
    %0 = vector.load %arg2[%c0, %c0_0, %c0_1] : memref<1x4x512xf32, #tpu.memory_space<vmem>>, vector<1x4x512xf32>
    %cst = arith.constant dense<0.000000e+00> : vector<1x512xf32>
    %1 = vector.multi_reduction <add>, %0, %cst [1] : vector<1x4x512xf32> to vector<1x512xf32>
    %2 = vector.shape_cast %1 : vector<1x512xf32> to vector<1x1x512xf32>
    %cst_2 = arith.constant 4.000000e+00 : f32
    %3 = vector.broadcast %cst_2 : f32 to vector<1x1x512xf32>
    %4 = arith.divf %2, %3 : vector<1x1x512xf32>
    %5 = vector.broadcast %4 : vector<1x1x512xf32> to vector<1x4x512xf32>
    %6 = arith.subf %0, %5 : vector<1x4x512xf32>
    %7 = vector.broadcast %4 : vector<1x1x512xf32> to vector<1x4x512xf32>
    %8 = arith.subf %0, %7 : vector<1x4x512xf32>
    %9 = arith.mulf %6, %8 : vector<1x4x512xf32>
    %cst_3 = arith.constant dense<0.000000e+00> : vector<1x512xf32>
    %10 = vector.multi_reduction <add>, %9, %cst_3 [1] : vector<1x4x512xf32> to vector<1x512xf32>
    %11 = vector.shape_cast %10 : vector<1x512xf32> to vector<1x1x512xf32>
    %cst_4 = arith.constant 4.000000e+00 : f32
    %12 = vector.broadcast %cst_4 : f32 to vector<1x1x512xf32>
    %13 = arith.divf %11, %12 : vector<1x1x512xf32>
    %cst_5 = arith.constant 9.99999974E-6 : f32
    %14 = vector.broadcast %cst_5 : f32 to vector<1x1x512xf32>
    %15 = arith.addf %13, %14 : vector<1x1x512xf32>
    %16 = math.rsqrt %15 : vector<1x1x512xf32>
    %17 = vector.broadcast %4 : vector<1x1x512xf32> to vector<1x4x512xf32>
    %18 = arith.subf %0, %17 : vector<1x4x512xf32>
    %19 = vector.broadcast %16 : vector<1x1x512xf32> to vector<1x4x512xf32>
    %20 = arith.mulf %18, %19 : vector<1x4x512xf32>
    %c0_6 = arith.constant 0 : index
    %c0_7 = arith.constant 0 : index
    %c0_8 = arith.constant 0 : index
    %21 = vector.load %arg3[%c0_6, %c0_7, %c0_8] : memref<1x4x1xf32, #tpu.memory_space<vmem>>, vector<1x4x1xf32>
    %22 = vector.broadcast %21 : vector<1x4x1xf32> to vector<1x4x512xf32>
    %23 = arith.mulf %20, %22 : vector<1x4x512xf32>
    %c0_9 = arith.constant 0 : index
    %c0_10 = arith.constant 0 : index
    %c0_11 = arith.constant 0 : index
    %24 = vector.load %arg4[%c0_9, %c0_10, %c0_11] : memref<1x4x512xf32, #tpu.memory_space<vmem>>, vector<1x4x512xf32>
    tpu.vector_store %arg4[%c0_9, %c0_10, %c0_11], %23 {strides = array<i32>} : memref<1x4x512xf32, #tpu.memory_space<vmem>>, vector<1x4x512xf32>,
    return
  }
  func.func @transform_0(%arg0: i32, %arg1: i32) -> (i32, i32, i32) {
    %c0_i32 = arith.constant 0 : i32
    %c0_i32_0 = arith.constant 0 : i32
    return %arg0, %c0_i32, %arg1 : i32, i32, i32
  }
  func.func @transform_1(%arg0: i32, %arg1: i32) -> (i32, i32, i32) {
    %c0_i32 = arith.constant 0 : i32
    %c0_i32_0 = arith.constant 0 : i32
    %c0_i32_1 = arith.constant 0 : i32
    %c0_i32_2 = arith.constant 0 : i32
    return %c0_i32, %c0_i32_0, %c0_i32_1 : i32, i32, i32
  }
  func.func @transform_2(%arg0: i32, %arg1: i32) -> (i32, i32, i32) {
    %c0_i32 = arith.constant 0 : i32
    %c0_i32_0 = arith.constant 0 : i32
    return %arg0, %c0_i32, %arg1 : i32, i32, i32
  }
}

</mosaic_0001>

<llo_original>
// kernel: tpu_custom_call.1
$region0: #{tpu_custom_call.1}
  #allocation0 [shape = 'u32[]', space=smem, size = 0x4, offset = 0x4, fixed_abs, tag = 'smem constant byte address 0x4 - core index']
  #allocation1 [shape = 'u32[144,128]{1,0:T(1,128)}', space=vmem, size = 0x12000, scoped, tag = 'internal scratch']
  %s0 = inlined_call_operand.hbm [shape: f32[2,4,512], index: 0, kind: input, shape index: {}]
  %s1 = inlined_call_operand.vmem [shape: f32[1,4,1], index: 1, kind: input, shape index: {}]
  %s2 = inlined_call_operand.hbm [shape: f32[2,4,512], index: 2, kind: output, shape index: {}]
  %s3 = sld [smem:[#allocation0]]
  $region45: #{tpu_custom_call.1} parent=0
    _
  %s5 = ssub.s32 1, %s3
  %s6 = scalar_select 0, %s5, %s3
  $region1: #{tpu_custom_call.1} parent=0
    #allocation2 [shape = 'u8[16384]{0}', space=vmem, size = 0x4000, scoped, tag = 'input window, operand 0']
    #allocation3 [shape = 's32[2]{0}', space=sflag, size = 0x8, scoped, tag = 'scoped memory for tpu_custom_call.1']
    #allocation4 [shape = 's32[2]{0}', space=sflag, size = 0x8, scoped, tag = 'scoped memory for tpu_custom_call.1']
    #allocation5 [shape = 'u8[16384]{0}', space=vmem, size = 0x4000, scoped, tag = 'output window, operand 0']
    %7 = vsyncpa [#allocation3], 0
    %s8 = scalar_lea.sflag [#allocation3], 1
    %9 = vsyncpa %s8, 0
    %10 = vsyncpa [#allocation4], 0
    %s11 = scalar_lea.sflag [#allocation4], 1
    %12 = vsyncpa %s11, 0
    loop: start=0, step=1, limit=4
    $region2: #{tpu_custom_call.1} parent=1 // loop_pre_header
      _
    $region3: #{tpu_custom_call.1} parent=1 // loop_header
      %s14 = sphi 0, %s18
      %p15 = scmp.ge.s32.totalorder %s14, 4
      %s21 = sphi 0, %s33
      %s22 = sphi 0, %s29
      %s23 = sphi 0, %s21
      %s24 = sphi 0, %s22
      %s25 = sphi 0, %s23
      %s26 = sphi 0, %s24
      %s38 = sphi 0, %s40
      %s41 = sphi 0, %s38
      %s42 = sphi 0, %s41
      %s58 = sphi 0, %s42
      %s62 = sphi 0, %s62
      %s64 = sphi 0, %s62
      %s65 = sphi 0, %s64
      %s79 = sphi 0, %s65
      %s87 = sphi 0, %s89
      %s90 = sphi 0, %s87
      %s91 = sphi 0, %s90
      %s107 = sphi 0, %s91
    $region4: #{tpu_custom_call.1} parent=1 // loop_header_branch
      %17 = sbr.rel (%p15) target = $region8
    $region5: #{tpu_custom_call.1} parent=1 // loop_body
      %s19 = ssub.s32 %s14, 1
      %s20 = ssub.s32 %s14, 2
      %s27 = sadd.s32 1, %s22
      %p28 = scmp.ge.s32.totalorder %s27, 1
      %s29 = scalar_select %p28, 0, %s27
      %s30 = sadd.s32 1, %s21
      %s31 = scalar_select %p28, %s30, %s21
      %p32 = scmp.ge.s32.totalorder %s31, 2
      %s33 = scalar_select %p32, 0, %s31
      %s34 = ssub.s32 %s21, %s33
      %s35 = ssub.s32 %s22, %s29
      %s36 = sor.u32 %s34, %s35
      %p37 = scmp.eq.s32.totalorder %s36, 0
      %s39 = sadd.s32 %s38, 1
      %s40 = scalar_select %p37, %s38, %s39
      %p43 = pneg %p37
      %p44 = scmp.eq.s32.totalorder %s14, 1
      %p45 = por %p43, %p44
      %p46 = scmp.ne.s32.totalorder %s38, %s41
      %p47 = scmp.eq.s32.totalorder %s14, 0
      %p48 = por %p46, %p47
      %p49 = scmp.ne.s32.totalorder %s38, %s41
      %p50 = scmp.eq.s32.totalorder %s19, 1
      %p51 = por %p49, %p50
      %p52 = scmp.ne.s32.totalorder %s41, %s42
      %p53 = scmp.eq.s32.totalorder %s19, 0
      %p54 = por %p52, %p53
      %p55 = scmp.ne.s32.totalorder %s41, %s42
      %p56 = scmp.eq.s32.totalorder %s20, 1
      %p57 = por %p55, %p56
      %p59 = scmp.ne.s32.totalorder %s42, %s58
      %p60 = scmp.eq.s32.totalorder %s20, 0
      %p61 = por %p59, %p60
      %s63 = sadd.s32 %s62, 1
      %p66 = scmp.eq.s32.totalorder %s14, 1
      %p67 = scmp.ne.s32.totalorder %s62, %s64
      %p68 = scmp.eq.s32.totalorder %s14, 0
      %p69 = por %p67, %p68
      %p70 = scmp.ne.s32.totalorder %s62, %s64
      %p71 = scmp.eq.s32.totalorder %s19, 1
      %p72 = por %p70, %p71
      %p73 = scmp.ne.s32.totalorder %s64, %s65
      %p74 = scmp.eq.s32.totalorder %s19, 0
      %p75 = por %p73, %p74
      %p76 = scmp.ne.s32.totalorder %s64, %s65
      %p77 = scmp.eq.s32.totalorder %s20, 1
      %p78 = por %p76, %p77
      %p80 = scmp.ne.s32.totalorder %s65, %s79
      %p81 = scmp.eq.s32.totalorder %s20, 0
      %p82 = por %p80, %p81
      %s83 = ssub.s32 %s21, %s33
      %s84 = ssub.s32 %s22, %s29
      %s85 = sor.u32 %s83, %s84
      %p86 = scmp.eq.s32.totalorder %s85, 0
      %s88 = sadd.s32 %s87, 1
      %s89 = scalar_select %p86, %s87, %s88
      %p92 = pneg %p86
      %p93 = scmp.eq.s32.totalorder %s14, 1
      %p94 = por %p92, %p93
      %p95 = scmp.ne.s32.totalorder %s87, %s90
      %p96 = scmp.eq.s32.totalorder %s14, 0
      %p97 = por %p95, %p96
      %p98 = scmp.ne.s32.totalorder %s87, %s90
      %p99 = scmp.eq.s32.totalorder %s19, 1
      %p100 = por %p98, %p99
      %p101 = scmp.ne.s32.totalorder %s90, %s91
      %p102 = scmp.eq.s32.totalorder %s19, 0
      %p103 = por %p101, %p102
      %p104 = scmp.ne.s32.totalorder %s90, %s91
      %p105 = scmp.eq.s32.totalorder %s20, 1
      %p106 = por %p104, %p105
      %p108 = scmp.ne.s32.totalorder %s91, %s107
      %p109 = scmp.eq.s32.totalorder %s20, 0
      %p110 = por %p108, %p109
      %p111 = scmp.le.s32.totalorder 1, %s14
      %p112 = scmp.lt.s32.totalorder %s14, 3
      %p113 = pnand %p111, %p112
      %p114 = pneg %p113
      // Predicated region
      $region9: #{tpu_custom_call.1} parent=5 // pred_check
        _
      $region10: #{tpu_custom_call.1} parent=5 // pred_check_branch
        %116 = sbr.rel (%p113) target = $region12
      $region11: #{tpu_custom_call.1} parent=5 // pred_region
        %s117 = ssub.s32 %s14, 1
        // Predicated region
        $region13: #{tpu_custom_call.1} parent=11 // pred_check
          %p118 = pneg %p75
        $region14: #{tpu_custom_call.1} parent=11 // pred_check_branch
          %120 = sbr.rel (%p118) target = $region16
        $region15: #{tpu_custom_call.1} parent=11 // pred_region
          _
        $region16: #{tpu_custom_call.1} parent=11 // pred_fallthru
          _
      $region12: #{tpu_custom_call.1} parent=5 // pred_fallthru
        _
      %p121 = scmp.lt.s32.totalorder %s14, 2
      // Predicated region
      $region17: #{tpu_custom_call.1} parent=5 // pred_check
        %p122 = pneg %p121
      $region18: #{tpu_custom_call.1} parent=5 // pred_check_branch
        %124 = sbr.rel (%p122) target = $region20
      $region19: #{tpu_custom_call.1} parent=5 // pred_region
        // Predicated region
        $region21: #{tpu_custom_call.1} parent=19 // pred_check
          %p125 = pneg %p48
        $region22: #{tpu_custom_call.1} parent=19 // pred_check_branch
          %127 = sbr.rel (%p125) target = $region24
        $region23: #{tpu_custom_call.1} parent=19 // pred_region
          %s128 = sand.u32 %s38, 1
          %s129 = scalar_lea.sflag [#allocation3], %s128
          %s130 = sand.u32 %s38, 1
          %s131 = smul.addr %s130, 16
          %s132 = scalar_lea.vmem [#allocation2], %s131
          %s133 = smul.u32 4, %s22
          %s135 = ssub.s32 256, 256
          %136 = vsyncadd %s129, %s135
          %s137 = smul.addr %s21, 4
          %s138 = sadd.s32 %s133, %s137
          %s139 = smul.addr %s138, 64
          %s140 = scalar_lea.hbm %s0, %s139
          %s142 = sshll.u32 %s132, 4
          %s143 = int_to_ptr.vmem [resolvable:$true] %s142
          %145 = dma.hbm_to_vmem [thread:$0]  %s140, 256, %s143, %s129
        $region24: #{tpu_custom_call.1} parent=19 // pred_fallthru
          _
      $region20: #{tpu_custom_call.1} parent=5 // pred_fallthru
        _
      %p146 = scmp.le.s32.totalorder 1, %s14
      %p147 = scmp.lt.s32.totalorder %s14, 3
      %p148 = pnand %p146, %p147
      %p149 = pneg %p148
      // Predicated region
      $region25: #{tpu_custom_call.1} parent=5 // pred_check
        _
      $region26: #{tpu_custom_call.1} parent=5 // pred_check_branch
        %151 = sbr.rel (%p148) target = $region28
      $region27: #{tpu_custom_call.1} parent=5 // pred_region
        %s152 = ssub.s32 %s14, 1
        %s153 = sand.u32 %s41, 1
        %s154 = scalar_lea.sflag [#allocation3], %s153
        %s155 = sand.u32 %s41, 1
        %s156 = smul.addr %s155, 16
        %s157 = scalar_lea.vmem [#allocation2], %s156
        // Predicated region
        $region29: #{tpu_custom_call.1} parent=27 // pred_check
          %p158 = pneg %p54
        $region30: #{tpu_custom_call.1} parent=27 // pred_check_branch
          %160 = sbr.rel (%p158) target = $region32
        $region31: #{tpu_custom_call.1} parent=27 // pred_region
          %161 = dma.done %s154, 256
        $region32: #{tpu_custom_call.1} parent=27 // pred_fallthru
          _
        %s162 = sand.u32 %s41, 1
        %s163 = scalar_lea.sflag [#allocation3], %s162
        %s164 = sand.u32 %s41, 1
        %s165 = smul.addr %s164, 16
        %s166 = scalar_lea.vmem [#allocation2], %s165
        %p167 = pneg %p54
        %p168 = pneg %p51
        %p169 = pneg %p75
        %p170 = pneg %p72
        %p171 = pneg %p103
        %p172 = pneg %p100
        %s173 = sand.u32 %s90, 1
        %s174 = scalar_lea.sflag [#allocation4], %s173
        %s175 = sand.u32 %s90, 1
        %s176 = smul.addr %s175, 16
        %s177 = scalar_lea.vmem [#allocation5], %s176
        %s178 = smul.u32 4, %s24
        %s179 = smul.u32 4, %s24
        %v180 = vld [vmem:[%s157] sm:$0xff]
        %v181 = vld [vmem:[%s157 + $0x8] sm:$0xff]
        %v184 = vcombine.high %v180, %v180
        %v185 = vcombine.high %v181, %v181
        %vm188 = vcmask 1043456
        %v189 = vsel %vm188, %v180, 0.0
        %v190 = vrot.slane %v189, 4
        %v191 = vadd.f32 %v189, %v190
        %v192 = vrot.slane %v191, 2
        %v193 = vadd.f32 %v191, %v192
        %v194 = vrot.slane %v193, 1
        %v195 = vadd.f32 %v193, %v194
        %v196 = vsel %vm188, %v184, 0.0
        %v197 = vrot.slane %v196, 4
        %v198 = vadd.f32 %v196, %v197
        %v199 = vrot.slane %v198, 2
        %v200 = vadd.f32 %v198, %v199
        %v201 = vrot.slane %v200, 1
        %v202 = vadd.f32 %v200, %v201
        %v203 = vsel %vm188, %v181, 0.0
        %v204 = vrot.slane %v203, 4
        %v205 = vadd.f32 %v203, %v204
        %v206 = vrot.slane %v205, 2
        %v207 = vadd.f32 %v205, %v206
        %v208 = vrot.slane %v207, 1
        %v209 = vadd.f32 %v207, %v208
        %v210 = vsel %vm188, %v185, 0.0
        %v211 = vrot.slane %v210, 4
        %v212 = vadd.f32 %v210, %v211
        %v213 = vrot.slane %v212, 2
        %v214 = vadd.f32 %v212, %v213
        %v215 = vrot.slane %v214, 1
        %v216 = vadd.f32 %v214, %v215
        %v217 = vrcp.pop 4.0
        %v218 = vmul.f32 %v195, %v217
        %v219 = vmul.f32 %v202, %v217
        %v220 = vmul.f32 %v209, %v217
        %v221 = vmul.f32 %v216, %v217
        %v226 = vcombine.low %v218, %v219
        %v227 = vcombine.low %v220, %v221
        %v230 = vsub.f32 %v180, %v226
        %v231 = vsub.f32 %v181, %v227
        %v232 = vmul.f32 %v230, %v230
        %v233 = vmul.f32 %v231, %v231
        %v236 = vcombine.high %v232, %v232
        %v237 = vcombine.high %v233, %v233
        %v240 = vsel %vm188, %v232, 0.0
        %v241 = vrot.slane %v240, 4
        %v242 = vadd.f32 %v240, %v241
        %v243 = vrot.slane %v242, 2
        %v244 = vadd.f32 %v242, %v243
        %v245 = vrot.slane %v244, 1
        %v246 = vadd.f32 %v244, %v245
        %v247 = vsel %vm188, %v236, 0.0
        %v248 = vrot.slane %v247, 4
        %v249 = vadd.f32 %v247, %v248
        %v250 = vrot.slane %v249, 2
        %v251 = vadd.f32 %v249, %v250
        %v252 = vrot.slane %v251, 1
        %v253 = vadd.f32 %v251, %v252
        %v254 = vsel %vm188, %v233, 0.0
        %v255 = vrot.slane %v254, 4
        %v256 = vadd.f32 %v254, %v255
        %v257 = vrot.slane %v256, 2
        %v258 = vadd.f32 %v256, %v257
        %v259 = vrot.slane %v258, 1
        %v260 = vadd.f32 %v258, %v259
        %v261 = vsel %vm188, %v237, 0.0
        %v262 = vrot.slane %v261, 4
        %v263 = vadd.f32 %v261, %v262
        %v264 = vrot.slane %v263, 2
        %v265 = vadd.f32 %v263, %v264
        %v266 = vrot.slane %v265, 1
        %v267 = vadd.f32 %v265, %v266
        %v268 = vmul.f32 %v246, %v217
        %v269 = vmul.f32 %v253, %v217
        %v270 = vmul.f32 %v260, %v217
        %v271 = vmul.f32 %v267, %v217
        %v272 = vadd.f32 %v268, 1e-05
        %v273 = vadd.f32 %v269, 1e-05
        %v274 = vadd.f32 %v270, 1e-05
        %v275 = vadd.f32 %v271, 1e-05
        %v276 = vrsqrt.pop %v272
        %v277 = vrsqrt.pop %v273
        %v278 = vrsqrt.pop %v274
        %v279 = vrsqrt.pop %v275
        %v284 = vcombine.low %v276, %v277
        %v285 = vcombine.low %v278, %v279
        %v288 = vmul.f32 %v230, %v284
        %v289 = vmul.f32 %v231, %v285
        %v290 = vld [vmem:[%s1] sm:$0xf]
        %292 = vset.pattern.permute.xlu0 0
        %293 = vperm.xlu0 %292, %v290
        %v294 = vpop.permute.xlu0 %293
        %v296 = vunpack.c.l.s4 839922192
        %v297 = vunpack.c.0.s8 %v296
        %v298 = vlaneseq
        %v299 = vshrl.u32 %v298, 7
        %v300 = vsub.s32 %v297, %v299
        %v301 = vrot.slane %v294, %v300
        %v303 = vmul.f32 %v288, %v301
        %v304 = vmul.f32 %v289, %v301
        %305 = vst [vmem:[%s177] sm:$0xff] %v303
        %306 = vst [vmem:[%s177 + $0x8] sm:$0xff] %v304
        %s307 = sand.u32 %s90, 1
        %s308 = scalar_lea.sflag [#allocation4], %s307
        %s309 = sand.u32 %s90, 1
        %s310 = smul.addr %s309, 16
        %s311 = scalar_lea.vmem [#allocation5], %s310
        // Predicated region
        $region33: #{tpu_custom_call.1} parent=27 // pred_check
          %p312 = pneg %p100
        $region34: #{tpu_custom_call.1} parent=27 // pred_check_branch
          %314 = sbr.rel (%p312) target = $region36
        $region35: #{tpu_custom_call.1} parent=27 // pred_region
          %s315 = smul.u32 4, %s24
          %s317 = ssub.s32 256, 256
          %318 = vsyncadd %s308, %s317
          %s319 = smul.addr %s23, 4
          %s320 = sadd.s32 %s315, %s319
          %s321 = smul.addr %s320, 64
          %s322 = scalar_lea.hbm %s2, %s321
          %s324 = sshll.u32 %s311, 4
          %s325 = int_to_ptr.vmem [resolvable:$true] %s324
          %327 = dma.vmem_to_hbm [thread:$0]  %s325, 256, %s322, %s308
        $region36: #{tpu_custom_call.1} parent=27 // pred_fallthru
          _
      $region28: #{tpu_custom_call.1} parent=5 // pred_fallthru
        _
      %p328 = scmp.le.s32.totalorder 2, %s14
      // Predicated region
      $region37: #{tpu_custom_call.1} parent=5 // pred_check
        %p329 = pneg %p328
      $region38: #{tpu_custom_call.1} parent=5 // pred_check_branch
        %331 = sbr.rel (%p329) target = $region40
      $region39: #{tpu_custom_call.1} parent=5 // pred_region
        %s332 = ssub.s32 %s14, 2
        // Predicated region
        $region41: #{tpu_custom_call.1} parent=39 // pred_check
          %p333 = pneg %p106
        $region42: #{tpu_custom_call.1} parent=39 // pred_check_branch
          %335 = sbr.rel (%p333) target = $region44
        $region43: #{tpu_custom_call.1} parent=39 // pred_region
          %s336 = sand.u32 %s91, 1
          %s337 = scalar_lea.sflag [#allocation4], %s336
          %s338 = sand.u32 %s91, 1
          %s339 = smul.addr %s338, 16
          %s340 = scalar_lea.vmem [#allocation5], %s339
          %341 = dma.done %s337, 256
        $region44: #{tpu_custom_call.1} parent=39 // pred_fallthru
          _
      $region40: #{tpu_custom_call.1} parent=5 // pred_fallthru
        _
    $region6: #{tpu_custom_call.1} parent=1 // loop_footer
      %s18 = sadd.s32 1, %s14
    $region7: #{tpu_custom_call.1} parent=1 // loop_footer_branch
      %13 = sbr.rel target = $region3
    $region8: #{tpu_custom_call.1} parent=1 // loop_exit
      _
    %342 = vsyncpa [#allocation3], 1
    %s343 = scalar_lea.sflag [#allocation3], 1
    %344 = vsyncpa %s343, 1
    %345 = vsyncpa [#allocation4], 1
    %s346 = scalar_lea.sflag [#allocation4], 1
    %347 = vsyncpa %s346, 1

</llo_original>
